<compile_context>
chip_gen: v6e
topology: v6e:2x2x1
jax: 0.10.0
libtpu: 0.0.40
codegen_flags: <defaults>
</compile_context>

<pallas_src>
import functools

import jax
import jax.numpy as jnp
from jax.experimental import pallas as pl
from jax.experimental.pallas import tpu as pltpu


# -----------------------------------------------------------------------------
# Kernel
# -----------------------------------------------------------------------------
def _mlp_kernel(x_ref, w1, w2, w3, w4, w5, w6, b_ref, o_ref, *, out_dims):
    """Full MLP forward for one batch tile.

    x_ref : (tile_b, num_feature) bf16
    w*    : (d_in_pad, d_out_pad) bf16, BN already folded in, zero-padded
    b_ref : (8, 256) f32 packed folded biases, row i = layer i+1
    o_ref : (tile_b, 128) f32 lane-dense (num_classes columns are valid)
    """
    w_refs = (w1, w2, w3, w4, w5, w6)
    h = x_ref[...]  # bf16 activations feed the MXU directly
    for i, w_ref in enumerate(w_refs):
        d_out = out_dims[i]
        y = jnp.dot(h, w_ref[...], preferred_element_type=jnp.float32)
        y = y + b_ref[i:i + 1, :d_out]          # folded Linear bias + BN affine (f32)
        if i < 5:
            # ReLU in f32, recast to bf16 for the next MXU push.
            h = jnp.maximum(y, 0.0).astype(jnp.bfloat16)
        else:
            o_ref[...] = y.astype(o_ref.dtype)  # last layer: no BN / ReLU / dropout


# -----------------------------------------------------------------------------
# Parameter preparation: fold BN, pad to lane-friendly widths, cast to bf16
# -----------------------------------------------------------------------------
def _round_up(n, m):
    return ((n + m - 1) // m) * m


def prepare_params(params, num_feature, num_classes):
    dims = [num_feature, 128, 256, 64, 32, 16, num_classes]
    pad_dims = [num_feature, 128, 256, 128, 128, 128, 128]

    ws, biases = [], []
    for layer in range(6):
        d_in, d_out = dims[layer], dims[layer + 1]
        p_in, p_out = pad_dims[layer], pad_dims[layer + 1]
        w = params[f"w{layer + 1}"]
        b = params[f"b{layer + 1}"]
        if layer < 5:  # BatchNorm after all but the last Linear
            s = params[f"s{layer + 1}"]
            t = params[f"t{layer + 1}"]
            w = w * s          # fold BN scale into weight columns
            b = b * s + t      # fold BN shift into bias
        w_pad = jnp.zeros((p_in, p_out), jnp.float32).at[:d_in, :d_out].set(w)
        b_pad = jnp.zeros((p_out,), jnp.float32).at[:d_out].set(b[0])
        ws.append(w_pad.astype(jnp.bfloat16))
        biases.append(b_pad)

    max_w = max(pad_dims[1:])                       # 256
    b_packed = jnp.zeros((8, max_w), jnp.float32)   # 8 rows for sublane alignment
    for i, b in enumerate(biases):
        b_packed = b_packed.at[i, : b.shape[0]].set(b)

    return ws, b_packed, tuple(pad_dims[1:])


# -----------------------------------------------------------------------------
# Wrapper
# -----------------------------------------------------------------------------
def hand_model_forward(x, params, *, tile_b=None):
    """x: (B, num_feature) float32.  params: dict produced by init_params."""
    B, num_feature = x.shape
    num_classes = params["w6"].shape[1]
    assert num_classes <= 128, "output padding assumes num_classes <= 128"

    ws, b_packed, out_dims = prepare_params(params, num_feature, num_classes)

    # Large batch tile (MXU row utilization); >= 2 grid steps when possible (v7x).
    if tile_b is None:
        if B >= 1024:
            tile_b = 512
        elif B >= 16:
            tile_b = _round_up((B + 1) // 2, 8)
        else:
            tile_b = 8
    B_pad = _round_up(B, tile_b)

    x_bf16 = x.astype(jnp.bfloat16)
    if B_pad != B:
        x_bf16 = jnp.zeros((B_pad, num_feature), jnp.bfloat16).at[:B].set(x_bf16)

    def rep_spec(a):
        # Whole-array block, replicated (constant index) across the batch grid.
        nd = a.ndim
        return pl.BlockSpec(a.shape, lambda i, _nd=nd: (0,) * _nd)

    in_specs = [pl.BlockSpec((tile_b, num_feature), lambda i: (i, 0))]
    in_specs += [rep_spec(w) for w in ws]
    in_specs.append(rep_spec(b_packed))

    out_w = out_dims[-1]  # 128: lane-dense output, sliced back to num_classes below
    out_spec = pl.BlockSpec((tile_b, out_w), lambda i: (i, 0))

    kernel = functools.partial(_mlp_kernel, out_dims=out_dims)

    out = pl.pallas_call(
        kernel,
        out_shape=jax.ShapeDtypeStruct((B_pad, out_w), jnp.float32),
        grid=(B_pad // tile_b,),
        in_specs=in_specs,
        out_specs=out_spec,
        compiler_params=pltpu.CompilerParams(
            dimension_semantics=("parallel",),
            vmem_limit_bytes=32 * 1024 * 1024,
        ),
    )(x_bf16, *ws, b_packed)

    return out[:B, :num_classes]


# -----------------------------------------------------------------------------
# Deterministic parameter init (synthetic; no checkpoint loading)
# -----------------------------------------------------------------------------
def init_params(key, num_feature, num_classes):
    dims = [num_feature, 128, 256, 64, 32, 16, num_classes]
    bn_eps = 1e-5
    params = {}
    keys = jax.random.split(key, 64)
    k_idx = 0

    def nk():
        nonlocal k_idx
        k = keys[k_idx]
        k_idx += 1
        return k

    for layer in range(6):
        d_in, d_out = dims[layer], dims[layer + 1]
        w = (jax.random.normal(nk(), (d_in, d_out), jnp.float32)
             * (1.0 / jnp.sqrt(jnp.float32(d_in))))
        b = jax.random.normal(nk(), (1, d_out), jnp.float32) * 0.01
        params[f"w{layer + 1}"] = w
        params[f"b{layer + 1}"] = b

        if layer < 5:  # BatchNorm after all but the last Linear
            gamma = 1.0 + 0.1 * jax.random.normal(nk(), (1, d_out), jnp.float32)
            beta = 0.1 * jax.random.normal(nk(), (1, d_out), jnp.float32)
            running_mean = 0.1 * jax.random.normal(nk(), (1, d_out), jnp.float32)
            running_var = 1.0 + 0.1 * jnp.abs(
                jax.random.normal(nk(), (1, d_out), jnp.float32))
            scale = gamma / jnp.sqrt(running_var + bn_eps)
            shift = beta - running_mean * scale
            params[f"s{layer + 1}"] = scale
            params[f"t{layer + 1}"] = shift

    return params


# Pure-JAX (f32, unfolded BN) reference for a sanity check.
def reference_forward(x, params):
    h = x
    for layer in range(1, 6):
        h = h @ params[f"w{layer}"] + params[f"b{layer}"]
        h = h * params[f"s{layer}"] + params[f"t{layer}"]
        h = jnp.maximum(h, 0.0)
    # TODO(synk): Dropout(0.3) is identity in eval mode; training-mode dropout/BN
    # batch-stats are intentionally not implemented.
    return h @ params["w6"] + params["b6"]


# -----------------------------------------------------------------------------
if __name__ == "__main__":
    num_feature = 32
    num_classes = 10
    batch = 8

    key = jax.random.PRNGKey(0)
    k_x, k_p = jax.random.split(key)
    x = jax.random.normal(k_x, (batch, num_feature), jnp.float32)
    params = init_params(k_p, num_feature, num_classes)

    out = hand_model_forward(x, params)
    out = jax.block_until_ready(out)

    ref = reference_forward(x, params)
    assert out.shape == (batch, num_classes)
    # bf16 matmul inputs with f32 accumulation: loose-but-meaningful tolerance.
    assert jnp.allclose(out, ref, atol=1e-1, rtol=1e-1), "mismatch vs reference"

    print("KERNEL_OK")
</pallas_src>

<mosaic_0001>
module attributes {stable_mosaic.version = 11 : i64} {
  func.func @_mlp_kernel(%arg0: i32, %arg1: memref<8x32xbf16, #tpu.memory_space<vmem>>, %arg2: memref<32x128xbf16, #tpu.memory_space<vmem>>, %arg3: memref<128x256xbf16, #tpu.memory_space<vmem>>, %arg4: memref<256x128xbf16, #tpu.memory_space<vmem>>, %arg5: memref<128x128xbf16, #tpu.memory_space<vmem>>, %arg6: memref<128x128xbf16, #tpu.memory_space<vmem>>, %arg7: memref<128x128xbf16, #tpu.memory_space<vmem>>, %arg8: memref<8x256xf32, #tpu.memory_space<vmem>>, %arg9: memref<8x128xf32, #tpu.memory_space<vmem>>) attributes {dimension_semantics = [#tpu.dimension_semantics<parallel>], iteration_bounds = array<i64: 1>, scalar_prefetch = 0 : i64, scratch_operands = 0 : i64, tpu.core_type = #tpu.core_type<tc>, window_params = [{transform_indices = @transform_0, window_bounds = array<i64: 8, 32>}, {pipeline_mode = #tpu.pipeline_mode<synchronous>, transform_indices = @transform_1, window_bounds = array<i64: 32, 128>}, {pipeline_mode = #tpu.pipeline_mode<synchronous>, transform_indices = @transform_2, window_bounds = array<i64: 128, 256>}, {pipeline_mode = #tpu.pipeline_mode<synchronous>, transform_indices = @transform_3, window_bounds = array<i64: 256, 128>}, {pipeline_mode = #tpu.pipeline_mode<synchronous>, transform_indices = @transform_4, window_bounds = array<i64: 128, 128>}, {pipeline_mode = #tpu.pipeline_mode<synchronous>, transform_indices = @transform_5, window_bounds = array<i64: 128, 128>}, {pipeline_mode = #tpu.pipeline_mode<synchronous>, transform_indices = @transform_6, window_bounds = array<i64: 128, 128>}, {pipeline_mode = #tpu.pipeline_mode<synchronous>, transform_indices = @transform_7, window_bounds = array<i64: 8, 256>}, {transform_indices = @transform_8, window_bounds = array<i64: 8, 128>}]} {
    %c0 = arith.constant 0 : index
    %c0_0 = arith.constant 0 : index
    %0 = vector.load %arg1[%c0, %c0_0] : memref<8x32xbf16, #tpu.memory_space<vmem>>, vector<8x32xbf16>
    %c0_1 = arith.constant 0 : index
    %c0_2 = arith.constant 0 : index
    %1 = vector.load %arg2[%c0_1, %c0_2] : memref<32x128xbf16, #tpu.memory_space<vmem>>, vector<32x128xbf16>
    %cst = arith.constant dense<0.000000e+00> : vector<8x128xf32>
    %2 = tpu.matmul %0, %1, %cst {dimension_numbers = #tpu.dot_dimension_numbers<[1], [0], [0], [1], [0, 0, 1, 1], [], []>} : vector<8x32xbf16>, vector<32x128xbf16>, vector<8x128xf32> -> vector<8x128xf32>
    %c0_3 = arith.constant 0 : index
    %c0_4 = arith.constant 0 : index
    %3 = vector.load %arg8[%c0_3, %c0_4] : memref<8x256xf32, #tpu.memory_space<vmem>>, vector<1x128xf32>
    %4 = vector.broadcast %3 : vector<1x128xf32> to vector<8x128xf32>
    %5 = arith.addf %2, %4 : vector<8x128xf32>
    %cst_5 = arith.constant 0.000000e+00 : f32
    %6 = vector.broadcast %cst_5 : f32 to vector<8x128xf32>
    %7 = arith.maximumf %5, %6 : vector<8x128xf32>
    %8 = arith.truncf %7 : vector<8x128xf32> to vector<8x128xbf16>
    %c0_6 = arith.constant 0 : index
    %c0_7 = arith.constant 0 : index
    %9 = vector.load %arg3[%c0_6, %c0_7] : memref<128x256xbf16, #tpu.memory_space<vmem>>, vector<128x256xbf16>
    %cst_8 = arith.constant dense<0.000000e+00> : vector<8x256xf32>
    %10 = tpu.matmul %8, %9, %cst_8 {dimension_numbers = #tpu.dot_dimension_numbers<[1], [0], [0], [1], [0, 0, 1, 1], [], []>} : vector<8x128xbf16>, vector<128x256xbf16>, vector<8x256xf32> -> vector<8x256xf32>
    %c1 = arith.constant 1 : index
    %c0_9 = arith.constant 0 : index
    %11 = vector.load %arg8[%c1, %c0_9] : memref<8x256xf32, #tpu.memory_space<vmem>>, vector<1x256xf32>
    %12 = vector.broadcast %11 : vector<1x256xf32> to vector<8x256xf32>
    %13 = arith.addf %10, %12 : vector<8x256xf32>
    %cst_10 = arith.constant 0.000000e+00 : f32
    %14 = vector.broadcast %cst_10 : f32 to vector<8x256xf32>
    %15 = arith.maximumf %13, %14 : vector<8x256xf32>
    %16 = arith.truncf %15 : vector<8x256xf32> to vector<8x256xbf16>
    %c0_11 = arith.constant 0 : index
    %c0_12 = arith.constant 0 : index
    %17 = vector.load %arg4[%c0_11, %c0_12] : memref<256x128xbf16, #tpu.memory_space<vmem>>, vector<256x128xbf16>
    %cst_13 = arith.constant dense<0.000000e+00> : vector<8x128xf32>
    %18 = tpu.matmul %16, %17, %cst_13 {dimension_numbers = #tpu.dot_dimension_numbers<[1], [0], [0], [1], [0, 0, 1, 1], [], []>} : vector<8x256xbf16>, vector<256x128xbf16>, vector<8x128xf32> -> vector<8x128xf32>
    %c2 = arith.constant 2 : index
    %c0_14 = arith.constant 0 : index
    %19 = vector.load %arg8[%c2, %c0_14] : memref<8x256xf32, #tpu.memory_space<vmem>>, vector<1x128xf32>
    %20 = vector.broadcast %19 : vector<1x128xf32> to vector<8x128xf32>
    %21 = arith.addf %18, %20 : vector<8x128xf32>
    %cst_15 = arith.constant 0.000000e+00 : f32
    %22 = vector.broadcast %cst_15 : f32 to vector<8x128xf32>
    %23 = arith.maximumf %21, %22 : vector<8x128xf32>
    %24 = arith.truncf %23 : vector<8x128xf32> to vector<8x128xbf16>
    %c0_16 = arith.constant 0 : index
    %c0_17 = arith.constant 0 : index
    %25 = vector.load %arg5[%c0_16, %c0_17] : memref<128x128xbf16, #tpu.memory_space<vmem>>, vector<128x128xbf16>
    %cst_18 = arith.constant dense<0.000000e+00> : vector<8x128xf32>
    %26 = tpu.matmul %24, %25, %cst_18 {dimension_numbers = #tpu.dot_dimension_numbers<[1], [0], [0], [1], [0, 0, 1, 1], [], []>} : vector<8x128xbf16>, vector<128x128xbf16>, vector<8x128xf32> -> vector<8x128xf32>
    %c3 = arith.constant 3 : index
    %c0_19 = arith.constant 0 : index
    %27 = vector.load %arg8[%c3, %c0_19] : memref<8x256xf32, #tpu.memory_space<vmem>>, vector<1x128xf32>
    %28 = vector.broadcast %27 : vector<1x128xf32> to vector<8x128xf32>
    %29 = arith.addf %26, %28 : vector<8x128xf32>
    %cst_20 = arith.constant 0.000000e+00 : f32
    %30 = vector.broadcast %cst_20 : f32 to vector<8x128xf32>
    %31 = arith.maximumf %29, %30 : vector<8x128xf32>
    %32 = arith.truncf %31 : vector<8x128xf32> to vector<8x128xbf16>
    %c0_21 = arith.constant 0 : index
    %c0_22 = arith.constant 0 : index
    %33 = vector.load %arg6[%c0_21, %c0_22] : memref<128x128xbf16, #tpu.memory_space<vmem>>, vector<128x128xbf16>
    %cst_23 = arith.constant dense<0.000000e+00> : vector<8x128xf32>
    %34 = tpu.matmul %32, %33, %cst_23 {dimension_numbers = #tpu.dot_dimension_numbers<[1], [0], [0], [1], [0, 0, 1, 1], [], []>} : vector<8x128xbf16>, vector<128x128xbf16>, vector<8x128xf32> -> vector<8x128xf32>
    %c4 = arith.constant 4 : index
    %c0_24 = arith.constant 0 : index
    %35 = vector.load %arg8[%c4, %c0_24] : memref<8x256xf32, #tpu.memory_space<vmem>>, vector<1x128xf32>
    %36 = vector.broadcast %35 : vector<1x128xf32> to vector<8x128xf32>
    %37 = arith.addf %34, %36 : vector<8x128xf32>
    %cst_25 = arith.constant 0.000000e+00 : f32
    %38 = vector.broadcast %cst_25 : f32 to vector<8x128xf32>
    %39 = arith.maximumf %37, %38 : vector<8x128xf32>
    %40 = arith.truncf %39 : vector<8x128xf32> to vector<8x128xbf16>
    %c0_26 = arith.constant 0 : index
    %c0_27 = arith.constant 0 : index
    %41 = vector.load %arg7[%c0_26, %c0_27] : memref<128x128xbf16, #tpu.memory_space<vmem>>, vector<128x128xbf16>
    %cst_28 = arith.constant dense<0.000000e+00> : vector<8x128xf32>
    %42 = tpu.matmul %40, %41, %cst_28 {dimension_numbers = #tpu.dot_dimension_numbers<[1], [0], [0], [1], [0, 0, 1, 1], [], []>} : vector<8x128xbf16>, vector<128x128xbf16>, vector<8x128xf32> -> vector<8x128xf32>
    %c5 = arith.constant 5 : index
    %c0_29 = arith.constant 0 : index
    %43 = vector.load %arg8[%c5, %c0_29] : memref<8x256xf32, #tpu.memory_space<vmem>>, vector<1x128xf32>
    %44 = vector.broadcast %43 : vector<1x128xf32> to vector<8x128xf32>
    %45 = arith.addf %42, %44 : vector<8x128xf32>
    %c0_30 = arith.constant 0 : index
    %c0_31 = arith.constant 0 : index
    %46 = vector.load %arg9[%c0_30, %c0_31] : memref<8x128xf32, #tpu.memory_space<vmem>>, vector<8x128xf32>
    tpu.vector_store %arg9[%c0_30, %c0_31], %45 {strides = array<i32>} : memref<8x128xf32, #tpu.memory_space<vmem>>, vector<8x128xf32>,
    return
  }
  func.func @transform_0(%arg0: i32) -> (i32, i32) {
    %c0_i32 = arith.constant 0 : i32
    %c0_i32_0 = arith.constant 0 : i32
    return %arg0, %c0_i32 : i32, i32
  }
  func.func @transform_1(%arg0: i32) -> (i32, i32) {
    %c0_i32 = arith.constant 0 : i32
    %c0_i32_0 = arith.constant 0 : i32
    %c0_i32_1 = arith.constant 0 : i32
    return %c0_i32, %c0_i32_0 : i32, i32
  }
  func.func @transform_2(%arg0: i32) -> (i32, i32) {
    %c0_i32 = arith.constant 0 : i32
    %c0_i32_0 = arith.constant 0 : i32
    %c0_i32_1 = arith.constant 0 : i32
    return %c0_i32, %c0_i32_0 : i32, i32
  }
  func.func @transform_3(%arg0: i32) -> (i32, i32) {
    %c0_i32 = arith.constant 0 : i32
    %c0_i32_0 = arith.constant 0 : i32
    %c0_i32_1 = arith.constant 0 : i32
    return %c0_i32, %c0_i32_0 : i32, i32
  }
  func.func @transform_4(%arg0: i32) -> (i32, i32) {
    %c0_i32 = arith.constant 0 : i32
    %c0_i32_0 = arith.constant 0 : i32
    %c0_i32_1 = arith.constant 0 : i32
    return %c0_i32, %c0_i32_0 : i32, i32
  }
  func.func @transform_5(%arg0: i32) -> (i32, i32) {
    %c0_i32 = arith.constant 0 : i32
    %c0_i32_0 = arith.constant 0 : i32
    %c0_i32_1 = arith.constant 0 : i32
    return %c0_i32, %c0_i32_0 : i32, i32
  }
  func.func @transform_6(%arg0: i32) -> (i32, i32) {
    %c0_i32 = arith.constant 0 : i32
    %c0_i32_0 = arith.constant 0 : i32
    %c0_i32_1 = arith.constant 0 : i32
    return %c0_i32, %c0_i32_0 : i32, i32
  }
  func.func @transform_7(%arg0: i32) -> (i32, i32) {
    %c0_i32 = arith.constant 0 : i32
    %c0_i32_0 = arith.constant 0 : i32
    %c0_i32_1 = arith.constant 0 : i32
    return %c0_i32, %c0_i32_0 : i32, i32
  }
  func.func @transform_8(%arg0: i32) -> (i32, i32) {
    %c0_i32 = arith.constant 0 : i32
    %c0_i32_0 = arith.constant 0 : i32
    return %arg0, %c0_i32 : i32, i32
  }
}

</mosaic_0001>

<llo_original>
// kernel: tpu_custom_call.1
$region0: #{tpu_custom_call.1}
  #allocation0 [shape = 'u32[]', space=smem, size = 0x4, offset = 0x4, fixed_abs, tag = 'smem constant byte address 0x4 - core index']
  #allocation1 [shape = 'u32[144,128]{1,0:T(1,128)}', space=vmem, size = 0x12000, scoped, tag = 'internal scratch']
  %s0 = inlined_call_operand.hbm [shape: bf16[8,32], index: 0, kind: input, shape index: {}]
  %s1 = inlined_call_operand.hbm [shape: bf16[32,128], index: 1, kind: input, shape index: {}]
  %s2 = inlined_call_operand.hbm [shape: bf16[128,256], index: 2, kind: input, shape index: {}]
  %s3 = inlined_call_operand.hbm [shape: bf16[256,128], index: 3, kind: input, shape index: {}]
  %s4 = inlined_call_operand.hbm [shape: bf16[128,128], index: 4, kind: input, shape index: {}]
  %s5 = inlined_call_operand.hbm [shape: bf16[128,128], index: 5, kind: input, shape index: {}]
  %s6 = inlined_call_operand.hbm [shape: bf16[128,128], index: 6, kind: input, shape index: {}]
  %s7 = inlined_call_operand.hbm [shape: f32[8,256], index: 7, kind: input, shape index: {}]
  %s8 = inlined_call_operand.hbm [shape: f32[8,128], index: 8, kind: output, shape index: {}]
  %s9 = sld [smem:[#allocation0]]
  $region74: #{tpu_custom_call.1} parent=0
    _
  %s11 = ssub.s32 1, %s9
  %s12 = scalar_select 0, %s11, %s9
  $region1: #{tpu_custom_call.1} parent=0
    #allocation2 [shape = 'u8[2048]{0}', space=vmem, size = 0x800, scoped, tag = 'input window, operand 0, single buffered']
    #allocation3 [shape = 's32[1]{0}', space=sflag, size = 0x4, scoped, tag = 'scoped memory for tpu_custom_call.1']
    #allocation4 [shape = 's32[1]{0}', space=sflag, size = 0x4, scoped, tag = 'scoped memory for tpu_custom_call.1']
    #allocation5 [shape = 'u8[8192]{0}', space=vmem, size = 0x2000, scoped, tag = 'input window, operand 1, single buffered']
    #allocation6 [shape = 's32[1]{0}', space=sflag, size = 0x4, scoped, tag = 'scoped memory for tpu_custom_call.1']
    #allocation7 [shape = 'u8[65536]{0}', space=vmem, size = 0x10000, scoped, tag = 'input window, operand 2, single buffered']
    #allocation8 [shape = 'u8[65536]{0}', space=vmem, size = 0x10000, scoped, tag = 'input window, operand 3, single buffered']
    #allocation9 [shape = 's32[1]{0}', space=sflag, size = 0x4, scoped, tag = 'scoped memory for tpu_custom_call.1']
    #allocation10 [shape = 'u8[32768]{0}', space=vmem, size = 0x8000, scoped, tag = 'input window, operand 4, single buffered']
    #allocation11 [shape = 'u8[32768]{0}', space=vmem, size = 0x8000, scoped, tag = 'input window, operand 5, single buffered']
    #allocation12 [shape = 's32[1]{0}', space=sflag, size = 0x4, scoped, tag = 'scoped memory for tpu_custom_call.1']
    #allocation13 [shape = 'u8[32768]{0}', space=vmem, size = 0x8000, scoped, tag = 'input window, operand 6, single buffered']
    #allocation14 [shape = 'u8[8192]{0}', space=vmem, size = 0x2000, scoped, tag = 'input window, operand 7, single buffered']
    #allocation15 [shape = 's32[1]{0}', space=sflag, size = 0x4, scoped, tag = 'scoped memory for tpu_custom_call.1']
    #allocation16 [shape = 'u8[4096]{0}', space=vmem, size = 0x1000, scoped, tag = 'output window, operand 0, single buffered']
    %13 = vsyncpa [#allocation3], 0
    %14 = vsyncpa [#allocation6], 0
    %15 = vsyncpa [#allocation9], 0
    %16 = vsyncpa [#allocation12], 0
    %17 = vsyncpa [#allocation15], 0
    %18 = vsyncpa [#allocation4], 0
    // Predicated region
    $region2: #{tpu_custom_call.1} parent=1 // pred_check
      _
    $region3: #{tpu_custom_call.1} parent=1 // pred_check_branch
      %20 = sbr.rel (0) target = $region5
    $region4: #{tpu_custom_call.1} parent=1 // pred_region
      %s22 = ssub.s32 64, 64
      %23 = vsyncadd [#allocation3], %s22
      %s25 = sshll.u32 [#allocation2], 4
      %s26 = int_to_ptr.vmem [resolvable:$true] %s25
      %28 = dma.hbm_to_vmem [thread:$0]  %s0, 64, %s26, [#allocation3]
    $region5: #{tpu_custom_call.1} parent=1 // pred_fallthru
      _
    // Predicated region
    $region6: #{tpu_custom_call.1} parent=1 // pred_check
      _
    $region7: #{tpu_custom_call.1} parent=1 // pred_check_branch
      %30 = sbr.rel (0) target = $region9
    $region8: #{tpu_custom_call.1} parent=1 // pred_region
      %s32 = ssub.s32 256, 256
      %33 = vsyncadd [#allocation6], %s32
      %s34 = sshll.u32 [#allocation5], 4
      %s35 = int_to_ptr.vmem [resolvable:$true] %s34
      %40 = dma.hbm_to_vmem [thread:$0]  %s1, 256, %s35, [#allocation6], 64, 64, 4
    $region9: #{tpu_custom_call.1} parent=1 // pred_fallthru
      _
    // Predicated region
    $region10: #{tpu_custom_call.1} parent=1 // pred_check
      _
    $region11: #{tpu_custom_call.1} parent=1 // pred_check_branch
      %42 = sbr.rel (0) target = $region13
    $region12: #{tpu_custom_call.1} parent=1 // pred_region
      %s44 = ssub.s32 2048, 2048
      %45 = vsyncadd [#allocation6], %s44
      %s46 = sshll.u32 [#allocation7], 4
      %s47 = int_to_ptr.vmem [resolvable:$true] %s46
      %52 = dma.hbm_to_vmem [thread:$0]  %s2, 2048, %s47, [#allocation6], 128, 128, 8
    $region13: #{tpu_custom_call.1} parent=1 // pred_fallthru
      _
    // Predicated region
    $region14: #{tpu_custom_call.1} parent=1 // pred_check
      _
    $region15: #{tpu_custom_call.1} parent=1 // pred_check_branch
      %54 = sbr.rel (0) target = $region17
    $region16: #{tpu_custom_call.1} parent=1 // pred_region
      %s56 = ssub.s32 2048, 2048
      %57 = vsyncadd [#allocation9], %s56
      %s58 = sshll.u32 [#allocation8], 4
      %s59 = int_to_ptr.vmem [resolvable:$true] %s58
      %64 = dma.hbm_to_vmem [thread:$0]  %s3, 2048, %s59, [#allocation9], 64, 64, 4
    $region17: #{tpu_custom_call.1} parent=1 // pred_fallthru
      _
    // Predicated region
    $region18: #{tpu_custom_call.1} parent=1 // pred_check
      _
    $region19: #{tpu_custom_call.1} parent=1 // pred_check_branch
      %66 = sbr.rel (0) target = $region21
    $region20: #{tpu_custom_call.1} parent=1 // pred_region
      %s68 = ssub.s32 1024, 1024
      %69 = vsyncadd [#allocation9], %s68
      %s70 = sshll.u32 [#allocation10], 4
      %s71 = int_to_ptr.vmem [resolvable:$true] %s70
      %76 = dma.hbm_to_vmem [thread:$0]  %s4, 1024, %s71, [#allocation9], 64, 64, 4
    $region21: #{tpu_custom_call.1} parent=1 // pred_fallthru
      _
    // Predicated region
    $region22: #{tpu_custom_call.1} parent=1 // pred_check
      _
    $region23: #{tpu_custom_call.1} parent=1 // pred_check_branch
      %78 = sbr.rel (0) target = $region25
    $region24: #{tpu_custom_call.1} parent=1 // pred_region
      %s80 = ssub.s32 1024, 1024
      %81 = vsyncadd [#allocation12], %s80
      %s82 = sshll.u32 [#allocation11], 4
      %s83 = int_to_ptr.vmem [resolvable:$true] %s82
      %88 = dma.hbm_to_vmem [thread:$0]  %s5, 1024, %s83, [#allocation12], 64, 64, 4
    $region25: #{tpu_custom_call.1} parent=1 // pred_fallthru
      _
    // Predicated region
    $region26: #{tpu_custom_call.1} parent=1 // pred_check
      _
    $region27: #{tpu_custom_call.1} parent=1 // pred_check_branch
      %90 = sbr.rel (0) target = $region29
    $region28: #{tpu_custom_call.1} parent=1 // pred_region
      %s92 = ssub.s32 1024, 1024
      %93 = vsyncadd [#allocation12], %s92
      %s94 = sshll.u32 [#allocation13], 4
      %s95 = int_to_ptr.vmem [resolvable:$true] %s94
      %100 = dma.hbm_to_vmem [thread:$0]  %s6, 1024, %s95, [#allocation12], 64, 64, 4
    $region29: #{tpu_custom_call.1} parent=1 // pred_fallthru
      _
    // Predicated region
    $region30: #{tpu_custom_call.1} parent=1 // pred_check
      _
    $region31: #{tpu_custom_call.1} parent=1 // pred_check_branch
      %102 = sbr.rel (0) target = $region33
    $region32: #{tpu_custom_call.1} parent=1 // pred_region
      %s104 = ssub.s32 256, 256
      %105 = vsyncadd [#allocation15], %s104
      %s107 = sshll.u32 [#allocation14], 4
      %s108 = int_to_ptr.vmem [resolvable:$true] %s107
      %110 = dma.hbm_to_vmem [thread:$0]  %s7, 256, %s108, [#allocation15]
    $region33: #{tpu_custom_call.1} parent=1 // pred_fallthru
      _
    // Predicated region
    $region34: #{tpu_custom_call.1} parent=1 // pred_check
      _
    $region35: #{tpu_custom_call.1} parent=1 // pred_check_branch
      %112 = sbr.rel (0) target = $region37
    $region36: #{tpu_custom_call.1} parent=1 // pred_region
      %113 = dma.done [#allocation3], 64
    $region37: #{tpu_custom_call.1} parent=1 // pred_fallthru
      _
    // Predicated region
    $region38: #{tpu_custom_call.1} parent=1 // pred_check
      _
    $region39: #{tpu_custom_call.1} parent=1 // pred_check_branch
      %115 = sbr.rel (0) target = $region41
    $region40: #{tpu_custom_call.1} parent=1 // pred_region
      %116 = dma.done [#allocation6], 256
    $region41: #{tpu_custom_call.1} parent=1 // pred_fallthru
      _
    // Predicated region
    $region42: #{tpu_custom_call.1} parent=1 // pred_check
      _
    $region43: #{tpu_custom_call.1} parent=1 // pred_check_branch
      %118 = sbr.rel (0) target = $region45
    $region44: #{tpu_custom_call.1} parent=1 // pred_region
      %119 = dma.done [#allocation6], 2048
    $region45: #{tpu_custom_call.1} parent=1 // pred_fallthru
      _
    // Predicated region
    $region46: #{tpu_custom_call.1} parent=1 // pred_check
      _
    $region47: #{tpu_custom_call.1} parent=1 // pred_check_branch
      %121 = sbr.rel (0) target = $region49
    $region48: #{tpu_custom_call.1} parent=1 // pred_region
      %122 = dma.done [#allocation9], 2048
    $region49: #{tpu_custom_call.1} parent=1 // pred_fallthru
      _
    // Predicated region
    $region50: #{tpu_custom_call.1} parent=1 // pred_check
      _
    $region51: #{tpu_custom_call.1} parent=1 // pred_check_branch
      %124 = sbr.rel (0) target = $region53
    $region52: #{tpu_custom_call.1} parent=1 // pred_region
      %125 = dma.done [#allocation9], 1024
    $region53: #{tpu_custom_call.1} parent=1 // pred_fallthru
      _
    // Predicated region
    $region54: #{tpu_custom_call.1} parent=1 // pred_check
      _
    $region55: #{tpu_custom_call.1} parent=1 // pred_check_branch
      %127 = sbr.rel (0) target = $region57
    $region56: #{tpu_custom_call.1} parent=1 // pred_region
      %128 = dma.done [#allocation12], 1024
    $region57: #{tpu_custom_call.1} parent=1 // pred_fallthru
      _
    // Predicated region
    $region58: #{tpu_custom_call.1} parent=1 // pred_check
      _
    $region59: #{tpu_custom_call.1} parent=1 // pred_check_branch
      %130 = sbr.rel (0) target = $region61
    $region60: #{tpu_custom_call.1} parent=1 // pred_region
      %131 = dma.done [#allocation12], 1024
    $region61: #{tpu_custom_call.1} parent=1 // pred_fallthru
      _
    // Predicated region
    $region62: #{tpu_custom_call.1} parent=1 // pred_check
      _
    $region63: #{tpu_custom_call.1} parent=1 // pred_check_branch
      %133 = sbr.rel (0) target = $region65
    $region64: #{tpu_custom_call.1} parent=1 // pred_region
      %134 = dma.done [#allocation15], 256
    $region65: #{tpu_custom_call.1} parent=1 // pred_fallthru
      _
    %v136 = vld [vmem:[#allocation2] sm:$0xf]
    %v137 = vld [vmem:[#allocation5] sm:$0xf]
    %v138 = vld [vmem:[#allocation5 + $0x4] sm:$0xf]
    %v139 = vld [vmem:[#allocation5 + $0x8] sm:$0xf]
    %v140 = vld [vmem:[#allocation5 + $0xc] sm:$0xf]
    %v141 = vld [vmem:[#allocation14] ss:$0 sm:$0xff]
    %v146 = vunpack.c.l.b16 %v137
    %v147 = vunpack.c.l.b16 %v138
    %v148 = vunpack.c.l.b16 %v139
    %v149 = vunpack.c.l.b16 %v140
    %v150 = vpack.c.b16 %v147, %v146
    %v151 = vpack.c.b16 %v149, %v148
    %vm154 = vcmask 261120
    %v156 = vsel %vm154, %v136, 0
    %158 = vmatprep.subr.bf16.mxu0 0
    %159 = vmatpush1.bf16.msra.mxu0 0
    %160 = vmatprep.subr.bf16.mxu0 0
    %161 = vmatpush1.bf16.msra.mxu0 0
    %162 = vmatprep.subr.bf16.mxu0 0
    %163 = vmatpush1.bf16.msra.mxu0 0
    %164 = vmatprep.subr.bf16.mxu0 0
    %165 = vmatpush1.bf16.msra.mxu0 0
    %166 = vmatprep.subr.bf16.mxu0 0
    %167 = vmatpush1.bf16.msra.mxu0 0
    %168 = vmatprep.subr.bf16.mxu0 0
    %169 = vmatpush1.bf16.msra.mxu0 0
    %170 = vmatprep.subr.bf16.mxu0 0
    %171 = vmatpush1.bf16.msra.mxu0 %v151
    %172 = vmatprep.subr.bf16.mxu0 0
    %173 = vmatpush1.bf16.msra.mxu0 %v150
    %174 = vmatprep.subr.bf16.mxu0 0
    %175 = vmatpush2.bf16.msra.mxu0 0
    %176 = vmatprep.subr.bf16.mxu0 0
    %177 = vmatpush2.bf16.msra.mxu0 0
    %178 = vmatprep.subr.bf16.mxu0 0
    %179 = vmatpush2.bf16.msra.mxu0 0
    %180 = vmatprep.subr.bf16.mxu0 0
    %181 = vmatpush2.bf16.msra.mxu0 0
    %182 = vmatprep.subr.bf16.mxu0 0
    %183 = vmatpush2.bf16.msra.mxu0 0
    %184 = vmatprep.subr.bf16.mxu0 0
    %185 = vmatpush2.bf16.msra.mxu0 0
    %186 = vmatprep.subr.bf16.mxu0 0
    %187 = vmatpush2.bf16.msra.mxu0 0
    %188 = vmatprep.subr.bf16.mxu0 0
    %189 = vmatpush2.bf16.msra.mxu0 0
    %190 = vmatprep.mubr.bf16.mxu0 0
    %191 = vmatmul.mubr.bf16.gmra.mxu0 %v156
    %v192 = vpop.f32.mrf.mxu0
    %v193 = vadd.f32 %v141, %v192
    %v194 = vpop.f32.mrf.mxu0
    %v195 = vpop.f32.mrf.mxu0
    %v196 = vpop.f32.mrf.mxu0
    %197 = vdwg.mxu0
    %v198 = vmax.f32 %v193, 0.0
    %v199 = vpack.c.bf16 %v198, %v198
    %v200 = vld [vmem:[#allocation7] sm:$0xff]
    %v201 = vld [vmem:[#allocation7 + $0x8] sm:$0xff]
    %v202 = vld [vmem:[#allocation7 + $0x10] sm:$0xff]
    %v203 = vld [vmem:[#allocation7 + $0x18] sm:$0xff]
    %v204 = vld [vmem:[#allocation7 + $0x20] sm:$0xff]
    %v205 = vld [vmem:[#allocation7 + $0x28] sm:$0xff]
    %v206 = vld [vmem:[#allocation7 + $0x30] sm:$0xff]
    %v207 = vld [vmem:[#allocation7 + $0x38] sm:$0xff]
    %v208 = vld [vmem:[#allocation7 + $0x40] sm:$0xff]
    %v209 = vld [vmem:[#allocation7 + $0x48] sm:$0xff]
    %v210 = vld [vmem:[#allocation7 + $0x50] sm:$0xff]
    %v211 = vld [vmem:[#allocation7 + $0x58] sm:$0xff]
    %v212 = vld [vmem:[#allocation7 + $0x60] sm:$0xff]
    %v213 = vld [vmem:[#allocation7 + $0x68] sm:$0xff]
    %v214 = vld [vmem:[#allocation7 + $0x70] sm:$0xff]
    %v215 = vld [vmem:[#allocation7 + $0x78] sm:$0xff]
    %s216 = scalar_lea.vmem [#allocation14], 1
    %v217 = vld [vmem:[%s216] ss:$8 sm:$0x3]
    %v219 = vlaneseq
    %v220 = vshrl.u32 %v219, 7
    %v221 = vsub.s32 0, %v220
    %v222 = vrot.slane %v217, %v221
    %v223 = vlaneseq
    %v224 = vshrl.u32 %v223, 7
    %v225 = vsub.s32 1, %v224
    %v226 = vrot.slane %v217, %v225
    %v245 = vunpack.c.l.b16 %v200
    %v246 = vunpack.c.h.b16 %v200
    %v247 = vunpack.c.l.b16 %v201
    %v248 = vunpack.c.h.b16 %v201
    %v249 = vunpack.c.l.b16 %v202
    %v250 = vunpack.c.h.b16 %v202
    %v251 = vunpack.c.l.b16 %v203
    %v252 = vunpack.c.h.b16 %v203
    %v253 = vunpack.c.l.b16 %v204
    %v254 = vunpack.c.h.b16 %v204
    %v255 = vunpack.c.l.b16 %v205
    %v256 = vunpack.c.h.b16 %v205
    %v257 = vunpack.c.l.b16 %v206
    %v258 = vunpack.c.h.b16 %v206
    %v259 = vunpack.c.l.b16 %v207
    %v260 = vunpack.c.h.b16 %v207
    %v261 = vunpack.c.l.b16 %v208
    %v262 = vunpack.c.h.b16 %v208
    %v263 = vunpack.c.l.b16 %v209
    %v264 = vunpack.c.h.b16 %v209
    %v265 = vunpack.c.l.b16 %v210
    %v266 = vunpack.c.h.b16 %v210
    %v267 = vunpack.c.l.b16 %v211
    %v268 = vunpack.c.h.b16 %v211
    %v269 = vunpack.c.l.b16 %v212
    %v270 = vunpack.c.h.b16 %v212
    %v271 = vunpack.c.l.b16 %v213
    %v272 = vunpack.c.h.b16 %v213
    %v273 = vunpack.c.l.b16 %v214
    %v274 = vunpack.c.h.b16 %v214
    %v275 = vunpack.c.l.b16 %v215
    %v276 = vunpack.c.h.b16 %v215
    %v277 = vpack.c.b16 %v247, %v245
    %v278 = vpack.c.b16 %v248, %v246
    %v279 = vpack.c.b16 %v251, %v249
    %v280 = vpack.c.b16 %v252, %v250
    %v281 = vpack.c.b16 %v255, %v253
    %v282 = vpack.c.b16 %v256, %v254
    %v283 = vpack.c.b16 %v259, %v257
    %v284 = vpack.c.b16 %v260, %v258
    %v285 = vpack.c.b16 %v263, %v261
    %v286 = vpack.c.b16 %v264, %v262
    %v287 = vpack.c.b16 %v267, %v265
    %v288 = vpack.c.b16 %v268, %v266
    %v289 = vpack.c.b16 %v271, %v269
    %v290 = vpack.c.b16 %v272, %v270
    %v291 = vpack.c.b16 %v275, %v273
    %v292 = vpack.c.b16 %v276, %v274
    %309 = vmatprep.subr.bf16.mxu0 %v292
    %310 = vmatpush1.bf16.msra.mxu0 %v291
    %311 = vmatprep.subr.bf16.mxu0 %v290
    %312 = vmatpush1.bf16.msra.mxu0 %v289
    %313 = vmatprep.subr.bf16.mxu0 %v288
    %314 = vmatpush1.bf16.msra.mxu0 %v287
    %315 = vmatprep.subr.bf16.mxu0 %v286
    %316 = vmatpush1.bf16.msra.mxu0 %v285
    %317 = vmatprep.subr.bf16.mxu0 %v284
    %318 = vmatpush1.bf16.msra.mxu0 %v283
    %319 = vmatprep.subr.bf16.mxu0 %v282
    %320 = vmatpush1.bf16.msra.mxu0 %v281
    %321 = vmatprep.subr.bf16.mxu0 %v280
    %322 = vmatpush1.bf16.msra.mxu0 %v279
    %323 = vmatprep.subr.bf16.mxu0 %v278
    %324 = vmatpush1.bf16.msra.mxu0 %v277
    %325 = vmatprep.subr.bf16.mxu0 0
    %326 = vmatpush2.bf16.msra.mxu0 0
    %327 = vmatprep.subr.bf16.mxu0 0
    %328 = vmatpush2.bf16.msra.mxu0 0
    %329 = vmatprep.subr.bf16.mxu0 0
    %330 = vmatpush2.bf16.msra.mxu0 0
    %331 = vmatprep.subr.bf16.mxu0 0
    %332 = vmatpush2.bf16.msra.mxu0 0
    %333 = vmatprep.subr.bf16.mxu0 0
    %334 = vmatpush2.bf16.msra.mxu0 0
    %335 = vmatprep.subr.bf16.mxu0 0
    %336 = vmatpush2.bf16.msra.mxu0 0
    %337 = vmatprep.subr.bf16.mxu0 0
    %338 = vmatpush2.bf16.msra.mxu0 0
    %339 = vmatprep.subr.bf16.mxu0 0
    %340 = vmatpush2.bf16.msra.mxu0 0
    %341 = vmatprep.mubr.bf16.mxu0 0
    %342 = vmatmul.mubr.bf16.gmra.mxu0 %v199
    %v343 = vpop.f32.mrf.mxu0
    %v344 = vadd.f32 %v222, %v343
    %v345 = vpop.f32.mrf.mxu0
    %v346 = vadd.f32 %v226, %v345
    %v347 = vpop.f32.mrf.mxu0
    %v348 = vpop.f32.mrf.mxu0
    %349 = vdwg.mxu0
    %v350 = vmax.f32 %v344, 0.0
    %v351 = vmax.f32 %v346, 0.0
    %v352 = vpack.c.bf16 %v350, %v350
    %v353 = vpack.c.bf16 %v351, %v351
    %v354 = vld [vmem:[#allocation8] sm:$0xf]
    %v355 = vld [vmem:[#allocation8 + $0x4] sm:$0xf]
    %v356 = vld [vmem:[#allocation8 + $0x8] sm:$0xf]
    %v357 = vld [vmem:[#allocation8 + $0xc] sm:$0xf]
    %v358 = vld [vmem:[#allocation8 + $0x10] sm:$0xf]
    %v359 = vld [vmem:[#allocation8 + $0x14] sm:$0xf]
    %v360 = vld [vmem:[#allocation8 + $0x18] sm:$0xf]
    %v361 = vld [vmem:[#allocation8 + $0x1c] sm:$0xf]
    %v362 = vld [vmem:[#allocation8 + $0x20] sm:$0xf]
    %v363 = vld [vmem:[#allocation8 + $0x24] sm:$0xf]
    %v364 = vld [vmem:[#allocation8 + $0x28] sm:$0xf]
    %v365 = vld [vmem:[#allocation8 + $0x2c] sm:$0xf]
    %v366 = vld [vmem:[#allocation8 + $0x30] sm:$0xf]
    %v367 = vld [vmem:[#allocation8 + $0x34] sm:$0xf]
    %v368 = vld [vmem:[#allocation8 + $0x38] sm:$0xf]
    %v369 = vld [vmem:[#allocation8 + $0x3c] sm:$0xf]
    %v370 = vld [vmem:[#allocation8 + $0x40] sm:$0xf]
    %v371 = vld [vmem:[#allocation8 + $0x44] sm:$0xf]
    %v372 = vld [vmem:[#allocation8 + $0x48] sm:$0xf]
    %v373 = vld [vmem:[#allocation8 + $0x4c] sm:$0xf]
    %v374 = vld [vmem:[#allocation8 + $0x50] sm:$0xf]
    %v375 = vld [vmem:[#allocation8 + $0x54] sm:$0xf]
    %v376 = vld [vmem:[#allocation8 + $0x58] sm:$0xf]
    %v377 = vld [vmem:[#allocation8 + $0x5c] sm:$0xf]
    %v378 = vld [vmem:[#allocation8 + $0x60] sm:$0xf]
    %v379 = vld [vmem:[#allocation8 + $0x64] sm:$0xf]
    %v380 = vld [vmem:[#allocation8 + $0x68] sm:$0xf]
    %v381 = vld [vmem:[#allocation8 + $0x6c] sm:$0xf]
    %v382 = vld [vmem:[#allocation8 + $0x70] sm:$0xf]
    %v383 = vld [vmem:[#allocation8 + $0x74] sm:$0xf]
    %v384 = vld [vmem:[#allocation8 + $0x78] sm:$0xf]
    %v385 = vld [vmem:[#allocation8 + $0x7c] sm:$0xf]
    %v386 = vld [vmem:[#allocation14 + $0x2] ss:$0 sm:$0xff]
    %v419 = vunpack.c.l.b16 %v354
    %v420 = vunpack.c.l.b16 %v355
    %v421 = vunpack.c.l.b16 %v356
    %v422 = vunpack.c.l.b16 %v357
    %v423 = vunpack.c.l.b16 %v358
    %v424 = vunpack.c.l.b16 %v359
    %v425 = vunpack.c.l.b16 %v360
    %v426 = vunpack.c.l.b16 %v361
    %v427 = vunpack.c.l.b16 %v362
    %v428 = vunpack.c.l.b16 %v363
    %v429 = vunpack.c.l.b16 %v364
    %v430 = vunpack.c.l.b16 %v365
    %v431 = vunpack.c.l.b16 %v366
    %v432 = vunpack.c.l.b16 %v367
    %v433 = vunpack.c.l.b16 %v368
    %v434 = vunpack.c.l.b16 %v369
    %v435 = vunpack.c.l.b16 %v370
    %v436 = vunpack.c.l.b16 %v371
    %v437 = vunpack.c.l.b16 %v372
    %v438 = vunpack.c.l.b16 %v373
    %v439 = vunpack.c.l.b16 %v374
    %v440 = vunpack.c.l.b16 %v375
    %v441 = vunpack.c.l.b16 %v376
    %v442 = vunpack.c.l.b16 %v377
    %v443 = vunpack.c.l.b16 %v378
    %v444 = vunpack.c.l.b16 %v379
    %v445 = vunpack.c.l.b16 %v380
    %v446 = vunpack.c.l.b16 %v381
    %v447 = vunpack.c.l.b16 %v382
    %v448 = vunpack.c.l.b16 %v383
    %v449 = vunpack.c.l.b16 %v384
    %v450 = vunpack.c.l.b16 %v385
    %v451 = vpack.c.b16 %v420, %v419
    %v452 = vpack.c.b16 %v422, %v421
    %v453 = vpack.c.b16 %v424, %v423
    %v454 = vpack.c.b16 %v426, %v425
    %v455 = vpack.c.b16 %v428, %v427
    %v456 = vpack.c.b16 %v430, %v429
    %v457 = vpack.c.b16 %v432, %v431
    %v458 = vpack.c.b16 %v434, %v433
    %v459 = vpack.c.b16 %v436, %v435
    %v460 = vpack.c.b16 %v438, %v437
    %v461 = vpack.c.b16 %v440, %v439
    %v462 = vpack.c.b16 %v442, %v441
    %v463 = vpack.c.b16 %v444, %v443
    %v464 = vpack.c.b16 %v446, %v445
    %v465 = vpack.c.b16 %v448, %v447
    %v466 = vpack.c.b16 %v450, %v449
    %483 = vmatprep.subr.bf16.mxu0 0
    %484 = vmatpush1.bf16.msra.mxu0 %v458
    %485 = vmatprep.subr.bf16.mxu0 0
    %486 = vmatpush1.bf16.msra.mxu0 %v457
    %487 = vmatprep.subr.bf16.mxu0 0
    %488 = vmatpush1.bf16.msra.mxu0 %v456
    %489 = vmatprep.subr.bf16.mxu0 0
    %490 = vmatpush1.bf16.msra.mxu0 %v455
    %491 = vmatprep.subr.bf16.mxu0 0
    %492 = vmatpush1.bf16.msra.mxu0 %v454
    %493 = vmatprep.subr.bf16.mxu0 0
    %494 = vmatpush1.bf16.msra.mxu0 %v453
    %495 = vmatprep.subr.bf16.mxu0 0
    %496 = vmatpush1.bf16.msra.mxu0 %v452
    %497 = vmatprep.subr.bf16.mxu0 0
    %498 = vmatpush1.bf16.msra.mxu0 %v451
    %499 = vmatprep.subr.bf16.mxu0 0
    %500 = vmatpush2.bf16.msra.mxu0 %v466
    %501 = vmatprep.subr.bf16.mxu0 0
    %502 = vmatpush2.bf16.msra.mxu0 %v465
    %503 = vmatprep.subr.bf16.mxu0 0
    %504 = vmatpush2.bf16.msra.mxu0 %v464
    %505 = vmatprep.subr.bf16.mxu0 0
    %506 = vmatpush2.bf16.msra.mxu0 %v463
    %507 = vmatprep.subr.bf16.mxu0 0
    %508 = vmatpush2.bf16.msra.mxu0 %v462
    %509 = vmatprep.subr.bf16.mxu0 0
    %510 = vmatpush2.bf16.msra.mxu0 %v461
    %511 = vmatprep.subr.bf16.mxu0 0
    %512 = vmatpush2.bf16.msra.mxu0 %v460
    %513 = vmatprep.subr.bf16.mxu0 0
    %514 = vmatpush2.bf16.msra.mxu0 %v459
    %515 = vmatprep.mubr.bf16.mxu0 %v353
    %516 = vmatmul.mubr.bf16.gmra.mxu0 %v352
    %v517 = vpop.f32.mrf.mxu0
    %v518 = vadd.f32 %v386, %v517
    %v519 = vpop.f32.mrf.mxu0
    %v520 = vpop.f32.mrf.mxu0
    %v521 = vpop.f32.mrf.mxu0
    %522 = vdwg.mxu0
    %v523 = vmax.f32 %v518, 0.0
    %v524 = vpack.c.bf16 %v523, %v523
    %v525 = vld [vmem:[#allocation10] sm:$0xf]
    %v526 = vld [vmem:[#allocation10 + $0x4] sm:$0xf]
    %v527 = vld [vmem:[#allocation10 + $0x8] sm:$0xf]
    %v528 = vld [vmem:[#allocation10 + $0xc] sm:$0xf]
    %v529 = vld [vmem:[#allocation10 + $0x10] sm:$0xf]
    %v530 = vld [vmem:[#allocation10 + $0x14] sm:$0xf]
    %v531 = vld [vmem:[#allocation10 + $0x18] sm:$0xf]
    %v532 = vld [vmem:[#allocation10 + $0x1c] sm:$0xf]
    %v533 = vld [vmem:[#allocation10 + $0x20] sm:$0xf]
    %v534 = vld [vmem:[#allocation10 + $0x24] sm:$0xf]
    %v535 = vld [vmem:[#allocation10 + $0x28] sm:$0xf]
    %v536 = vld [vmem:[#allocation10 + $0x2c] sm:$0xf]
    %v537 = vld [vmem:[#allocation10 + $0x30] sm:$0xf]
    %v538 = vld [vmem:[#allocation10 + $0x34] sm:$0xf]
    %v539 = vld [vmem:[#allocation10 + $0x38] sm:$0xf]
    %v540 = vld [vmem:[#allocation10 + $0x3c] sm:$0xf]
    %v541 = vld [vmem:[#allocation14 + $0x3] ss:$0 sm:$0xff]
    %v558 = vunpack.c.l.b16 %v525
    %v559 = vunpack.c.l.b16 %v526
    %v560 = vunpack.c.l.b16 %v527
    %v561 = vunpack.c.l.b16 %v528
    %v562 = vunpack.c.l.b16 %v529
    %v563 = vunpack.c.l.b16 %v530
    %v564 = vunpack.c.l.b16 %v531
    %v565 = vunpack.c.l.b16 %v532
    %v566 = vunpack.c.l.b16 %v533
    %v567 = vunpack.c.l.b16 %v534
    %v568 = vunpack.c.l.b16 %v535
    %v569 = vunpack.c.l.b16 %v536
    %v570 = vunpack.c.l.b16 %v537
    %v571 = vunpack.c.l.b16 %v538
    %v572 = vunpack.c.l.b16 %v539
    %v573 = vunpack.c.l.b16 %v540
    %v574 = vpack.c.b16 %v559, %v558
    %v575 = vpack.c.b16 %v561, %v560
    %v576 = vpack.c.b16 %v563, %v562
    %v577 = vpack.c.b16 %v565, %v564
    %v578 = vpack.c.b16 %v567, %v566
    %v579 = vpack.c.b16 %v569, %v568
    %v580 = vpack.c.b16 %v571, %v570
    %v581 = vpack.c.b16 %v573, %v572
    %590 = vmatprep.subr.bf16.mxu0 0
    %591 = vmatpush1.bf16.msra.mxu0 %v581
    %592 = vmatprep.subr.bf16.mxu0 0
    %593 = vmatpush1.bf16.msra.mxu0 %v580
    %594 = vmatprep.subr.bf16.mxu0 0
    %595 = vmatpush1.bf16.msra.mxu0 %v579
    %596 = vmatprep.subr.bf16.mxu0 0
    %597 = vmatpush1.bf16.msra.mxu0 %v578
    %598 = vmatprep.subr.bf16.mxu0 0
    %599 = vmatpush1.bf16.msra.mxu0 %v577
    %600 = vmatprep.subr.bf16.mxu0 0
    %601 = vmatpush1.bf16.msra.mxu0 %v576
    %602 = vmatprep.subr.bf16.mxu0 0
    %603 = vmatpush1.bf16.msra.mxu0 %v575
    %604 = vmatprep.subr.bf16.mxu0 0
    %605 = vmatpush1.bf16.msra.mxu0 %v574
    %606 = vmatprep.subr.bf16.mxu0 0
    %607 = vmatpush2.bf16.msra.mxu0 0
    %608 = vmatprep.subr.bf16.mxu0 0
    %609 = vmatpush2.bf16.msra.mxu0 0
    %610 = vmatprep.subr.bf16.mxu0 0
    %611 = vmatpush2.bf16.msra.mxu0 0
    %612 = vmatprep.subr.bf16.mxu0 0
    %613 = vmatpush2.bf16.msra.mxu0 0
    %614 = vmatprep.subr.bf16.mxu0 0
    %615 = vmatpush2.bf16.msra.mxu0 0
    %616 = vmatprep.subr.bf16.mxu0 0
    %617 = vmatpush2.bf16.msra.mxu0 0
    %618 = vmatprep.subr.bf16.mxu0 0
    %619 = vmatpush2.bf16.msra.mxu0 0
    %620 = vmatprep.subr.bf16.mxu0 0
    %621 = vmatpush2.bf16.msra.mxu0 0
    %622 = vmatprep.mubr.bf16.mxu0 0
    %623 = vmatmul.mubr.bf16.gmra.mxu0 %v524
    %v624 = vpop.f32.mrf.mxu0
    %v625 = vadd.f32 %v541, %v624
    %v626 = vpop.f32.mrf.mxu0
    %v627 = vpop.f32.mrf.mxu0
    %v628 = vpop.f32.mrf.mxu0
    %629 = vdwg.mxu0
    %v630 = vmax.f32 %v625, 0.0
    %v631 = vpack.c.bf16 %v630, %v630
    %v632 = vld [vmem:[#allocation11] sm:$0xf]
    %v633 = vld [vmem:[#allocation11 + $0x4] sm:$0xf]
    %v634 = vld [vmem:[#allocation11 + $0x8] sm:$0xf]
    %v635 = vld [vmem:[#allocation11 + $0xc] sm:$0xf]
    %v636 = vld [vmem:[#allocation11 + $0x10] sm:$0xf]
    %v637 = vld [vmem:[#allocation11 + $0x14] sm:$0xf]
    %v638 = vld [vmem:[#allocation11 + $0x18] sm:$0xf]
    %v639 = vld [vmem:[#allocation11 + $0x1c] sm:$0xf]
    %v640 = vld [vmem:[#allocation11 + $0x20] sm:$0xf]
    %v641 = vld [vmem:[#allocation11 + $0x24] sm:$0xf]
    %v642 = vld [vmem:[#allocation11 + $0x28] sm:$0xf]
    %v643 = vld [vmem:[#allocation11 + $0x2c] sm:$0xf]
    %v644 = vld [vmem:[#allocation11 + $0x30] sm:$0xf]
    %v645 = vld [vmem:[#allocation11 + $0x34] sm:$0xf]
    %v646 = vld [vmem:[#allocation11 + $0x38] sm:$0xf]
    %v647 = vld [vmem:[#allocation11 + $0x3c] sm:$0xf]
    %v648 = vld [vmem:[#allocation14 + $0x4] ss:$0 sm:$0xff]
    %v665 = vunpack.c.l.b16 %v632
    %v666 = vunpack.c.l.b16 %v633
    %v667 = vunpack.c.l.b16 %v634
    %v668 = vunpack.c.l.b16 %v635
    %v669 = vunpack.c.l.b16 %v636
    %v670 = vunpack.c.l.b16 %v637
    %v671 = vunpack.c.l.b16 %v638
    %v672 = vunpack.c.l.b16 %v639
    %v673 = vunpack.c.l.b16 %v640
    %v674 = vunpack.c.l.b16 %v641
    %v675 = vunpack.c.l.b16 %v642
    %v676 = vunpack.c.l.b16 %v643
    %v677 = vunpack.c.l.b16 %v644
    %v678 = vunpack.c.l.b16 %v645
    %v679 = vunpack.c.l.b16 %v646
    %v680 = vunpack.c.l.b16 %v647
    %v681 = vpack.c.b16 %v666, %v665
    %v682 = vpack.c.b16 %v668, %v667
    %v683 = vpack.c.b16 %v670, %v669
    %v684 = vpack.c.b16 %v672, %v671
    %v685 = vpack.c.b16 %v674, %v673
    %v686 = vpack.c.b16 %v676, %v675
    %v687 = vpack.c.b16 %v678, %v677
    %v688 = vpack.c.b16 %v680, %v679
    %697 = vmatprep.subr.bf16.mxu0 0
    %698 = vmatpush1.bf16.msra.mxu0 %v688
    %699 = vmatprep.subr.bf16.mxu0 0
    %700 = vmatpush1.bf16.msra.mxu0 %v687
    %701 = vmatprep.subr.bf16.mxu0 0
    %702 = vmatpush1.bf16.msra.mxu0 %v686
    %703 = vmatprep.subr.bf16.mxu0 0
    %704 = vmatpush1.bf16.msra.mxu0 %v685
    %705 = vmatprep.subr.bf16.mxu0 0
    %706 = vmatpush1.bf16.msra.mxu0 %v684
    %707 = vmatprep.subr.bf16.mxu0 0
    %708 = vmatpush1.bf16.msra.mxu0 %v683
    %709 = vmatprep.subr.bf16.mxu0 0
    %710 = vmatpush1.bf16.msra.mxu0 %v682
    %711 = vmatprep.subr.bf16.mxu0 0
    %712 = vmatpush1.bf16.msra.mxu0 %v681
    %713 = vmatprep.subr.bf16.mxu0 0
    %714 = vmatpush2.bf16.msra.mxu0 0
    %715 = vmatprep.subr.bf16.mxu0 0
    %716 = vmatpush2.bf16.msra.mxu0 0
    %717 = vmatprep.subr.bf16.mxu0 0
    %718 = vmatpush2.bf16.msra.mxu0 0
    %719 = vmatprep.subr.bf16.mxu0 0
    %720 = vmatpush2.bf16.msra.mxu0 0
    %721 = vmatprep.subr.bf16.mxu0 0
    %722 = vmatpush2.bf16.msra.mxu0 0
    %723 = vmatprep.subr.bf16.mxu0 0
    %724 = vmatpush2.bf16.msra.mxu0 0
    %725 = vmatprep.subr.bf16.mxu0 0
    %726 = vmatpush2.bf16.msra.mxu0 0
    %727 = vmatprep.subr.bf16.mxu0 0
    %728 = vmatpush2.bf16.msra.mxu0 0
    %729 = vmatprep.mubr.bf16.mxu0 0
    %730 = vmatmul.mubr.bf16.gmra.mxu0 %v631
    %v731 = vpop.f32.mrf.mxu0
    %v732 = vadd.f32 %v648, %v731
    %v733 = vpop.f32.mrf.mxu0
    %v734 = vpop.f32.mrf.mxu0
    %v735 = vpop.f32.mrf.mxu0
    %736 = vdwg.mxu0
    %v737 = vmax.f32 %v732, 0.0
    %v738 = vpack.c.bf16 %v737, %v737
    %v739 = vld [vmem:[#allocation13] sm:$0xf]
    %v740 = vld [vmem:[#allocation13 + $0x4] sm:$0xf]
    %v741 = vld [vmem:[#allocation13 + $0x8] sm:$0xf]
    %v742 = vld [vmem:[#allocation13 + $0xc] sm:$0xf]
    %v743 = vld [vmem:[#allocation13 + $0x10] sm:$0xf]
    %v744 = vld [vmem:[#allocation13 + $0x14] sm:$0xf]
    %v745 = vld [vmem:[#allocation13 + $0x18] sm:$0xf]
    %v746 = vld [vmem:[#allocation13 + $0x1c] sm:$0xf]
    %v747 = vld [vmem:[#allocation13 + $0x20] sm:$0xf]
    %v748 = vld [vmem:[#allocation13 + $0x24] sm:$0xf]
    %v749 = vld [vmem:[#allocation13 + $0x28] sm:$0xf]
    %v750 = vld [vmem:[#allocation13 + $0x2c] sm:$0xf]
    %v751 = vld [vmem:[#allocation13 + $0x30] sm:$0xf]
    %v752 = vld [vmem:[#allocation13 + $0x34] sm:$0xf]
    %v753 = vld [vmem:[#allocation13 + $0x38] sm:$0xf]
    %v754 = vld [vmem:[#allocation13 + $0x3c] sm:$0xf]
    %v755 = vld [vmem:[#allocation14 + $0x5] ss:$0 sm:$0xff]
    %v772 = vunpack.c.l.b16 %v739
    %v773 = vunpack.c.l.b16 %v740
    %v774 = vunpack.c.l.b16 %v741
    %v775 = vunpack.c.l.b16 %v742
    %v776 = vunpack.c.l.b16 %v743
    %v777 = vunpack.c.l.b16 %v744
    %v778 = vunpack.c.l.b16 %v745
    %v779 = vunpack.c.l.b16 %v746
    %v780 = vunpack.c.l.b16 %v747
    %v781 = vunpack.c.l.b16 %v748
    %v782 = vunpack.c.l.b16 %v749
    %v783 = vunpack.c.l.b16 %v750
    %v784 = vunpack.c.l.b16 %v751
    %v785 = vunpack.c.l.b16 %v752
    %v786 = vunpack.c.l.b16 %v753
    %v787 = vunpack.c.l.b16 %v754
    %v788 = vpack.c.b16 %v773, %v772
    %v789 = vpack.c.b16 %v775, %v774
    %v790 = vpack.c.b16 %v777, %v776
    %v791 = vpack.c.b16 %v779, %v778
    %v792 = vpack.c.b16 %v781, %v780
    %v793 = vpack.c.b16 %v783, %v782
    %v794 = vpack.c.b16 %v785, %v784
    %v795 = vpack.c.b16 %v787, %v786
    %804 = vmatprep.subr.bf16.mxu0 0
    %805 = vmatpush1.bf16.msra.mxu0 %v795
    %806 = vmatprep.subr.bf16.mxu0 0
    %807 = vmatpush1.bf16.msra.mxu0 %v794
    %808 = vmatprep.subr.bf16.mxu0 0
    %809 = vmatpush1.bf16.msra.mxu0 %v793
    %810 = vmatprep.subr.bf16.mxu0 0
    %811 = vmatpush1.bf16.msra.mxu0 %v792
    %812 = vmatprep.subr.bf16.mxu0 0
    %813 = vmatpush1.bf16.msra.mxu0 %v791
    %814 = vmatprep.subr.bf16.mxu0 0
    %815 = vmatpush1.bf16.msra.mxu0 %v790
    %816 = vmatprep.subr.bf16.mxu0 0
    %817 = vmatpush1.bf16.msra.mxu0 %v789
    %818 = vmatprep.subr.bf16.mxu0 0
    %819 = vmatpush1.bf16.msra.mxu0 %v788
    %820 = vmatprep.subr.bf16.mxu0 0
    %821 = vmatpush2.bf16.msra.mxu0 0
    %822 = vmatprep.subr.bf16.mxu0 0
    %823 = vmatpush2.bf16.msra.mxu0 0
    %824 = vmatprep.subr.bf16.mxu0 0
    %825 = vmatpush2.bf16.msra.mxu0 0
    %826 = vmatprep.subr.bf16.mxu0 0
    %827 = vmatpush2.bf16.msra.mxu0 0
    %828 = vmatprep.subr.bf16.mxu0 0
    %829 = vmatpush2.bf16.msra.mxu0 0
    %830 = vmatprep.subr.bf16.mxu0 0
    %831 = vmatpush2.bf16.msra.mxu0 0
    %832 = vmatprep.subr.bf16.mxu0 0
    %833 = vmatpush2.bf16.msra.mxu0 0
    %834 = vmatprep.subr.bf16.mxu0 0
    %835 = vmatpush2.bf16.msra.mxu0 0
    %836 = vmatprep.mubr.bf16.mxu0 0
    %837 = vmatmul.mubr.bf16.gmra.mxu0 %v738
    %v838 = vpop.f32.mrf.mxu0
    %v839 = vadd.f32 %v755, %v838
    %v840 = vpop.f32.mrf.mxu0
    %v841 = vpop.f32.mrf.mxu0
    %v842 = vpop.f32.mrf.mxu0
    %843 = vdwg.mxu0
    %844 = vst [vmem:[#allocation16] sm:$0xff] %v839
    // Predicated region
    $region66: #{tpu_custom_call.1} parent=1 // pred_check
      _
    $region67: #{tpu_custom_call.1} parent=1 // pred_check_branch
      %846 = sbr.rel (0) target = $region69
    $region68: #{tpu_custom_call.1} parent=1 // pred_region
      %s848 = ssub.s32 128, 128
      %849 = vsyncadd [#allocation4], %s848
      %s851 = sshll.u32 [#allocation16], 4
      %s852 = int_to_ptr.vmem [resolvable:$true] %s851
      %854 = dma.vmem_to_hbm [thread:$0]  %s852, 128, %s8, [#allocation4]
    $region69: #{tpu_custom_call.1} parent=1 // pred_fallthru
      _
    // Predicated region
    $region70: #{tpu_custom_call.1} parent=1 // pred_check
      _
    $region71: #{tpu_custom_call.1} parent=1 // pred_check_branch
      %856 = sbr.rel (0) target = $region73
    $region72: #{tpu_custom_call.1} parent=1 // pred_region
      %857 = dma.done [#allocation4], 128
    $region73: #{tpu_custom_call.1} parent=1 // pred_fallthru
      _
    %858 = vsyncpa [#allocation3], 1
    %859 = vsyncpa [#allocation6], 1
    %860 = vsyncpa [#allocation9], 1
    %861 = vsyncpa [#allocation12], 1
    %862 = vsyncpa [#allocation15], 1
    %863 = vsyncpa [#allocation4], 1

</llo_original>
